<compile_context>
chip_gen: v6e
topology: v6e:2x2x1
jax: 0.10.0
libtpu: 0.0.40
codegen_flags: <defaults>
</compile_context>

<pallas_src>
import functools

import jax
import jax.numpy as jnp
from jax.experimental import pallas as pl
from jax.experimental.pallas import tpu as pltpu


def _round_up(v, m):
    return ((v + m - 1) // m) * m


# ----------------------------------------------------------------------------------
# Fused  out = relu(x @ w + b)  tiled matmul kernel (bf16 in, f32 accumulate)
# ----------------------------------------------------------------------------------
def _linear_relu_kernel(x_ref, w_ref, b_ref, o_ref):
    """One (tm, tn) output tile; o_ref (f32) doubles as the accumulator across k.

    x_ref : (tm, tk) bf16
    w_ref : (tk, tn) bf16   (BN-folded, pre-transposed, pre-padded at init)
    b_ref : (1,  tn) f32    (BN-folded, pre-padded at init)
    o_ref : (tm, tn) f32    (resident across the k grid axis)
    """
    @pl.when(pl.program_id(2) == 0)
    def _():
        o_ref[...] = jnp.zeros_like(o_ref)

    o_ref[...] += jnp.dot(x_ref[...], w_ref[...],
                          preferred_element_type=jnp.float32)

    @pl.when(pl.program_id(2) == pl.num_programs(2) - 1)
    def _():
        o_ref[...] = jnp.maximum(o_ref[...] + b_ref[...], 0.0)


def _linear_relu(x, w_pad, b_pad, cfg):
    """relu(x @ w + b) with pre-padded bf16 weights.

    x     : (M, K) f32
    w_pad : (Kp, Np) bf16
    b_pad : (1, Np)  f32
    cfg   : static (K, N, Kp, Np, tm_cap, tn, tk)
    """
    K, N, Kp, Np, tm_cap, tn, tk = cfg
    M = x.shape[0]
    assert x.shape[1] == K

    tm = min(tm_cap, _round_up(M, 8))
    Mp = _round_up(M, tm)

    # Only the activation is padded/cast per call; fuses under jit.
    xp = jnp.pad(x, ((0, Mp - M), (0, Kp - K))).astype(jnp.bfloat16)

    grid = (Np // tn, Mp // tm, Kp // tk)   # (j, i, k): weight index is constant in i

    out = pl.pallas_call(
        _linear_relu_kernel,
        out_shape=jax.ShapeDtypeStruct((Mp, Np), jnp.float32),
        grid_spec=pltpu.PrefetchScalarGridSpec(
            num_scalar_prefetch=0,
            grid=grid,
            in_specs=[
                pl.BlockSpec((tm, tk), lambda j, i, k: (i, k)),   # activations
                pl.BlockSpec((tk, tn), lambda j, i, k: (k, j)),   # weights (K, N)
                pl.BlockSpec((1, tn), lambda j, i, k: (0, j)),    # bias
            ],
            out_specs=pl.BlockSpec((tm, tn), lambda j, i, k: (i, j)),
        ),
        compiler_params=pltpu.CompilerParams(
            dimension_semantics=("parallel", "parallel", "arbitrary"),
            vmem_limit_bytes=32 * 1024 * 1024),
    )(xp, w_pad, b_pad)
    return out[:M, :N]


@functools.partial(jax.jit, static_argnums=(2,))
def _dff_forward(x, params, cfgs):
    """Eval-mode DFF forward. bn1 is folded into layer 1; dropout is identity."""
    y = x.reshape(-1, cfgs[0][0]).astype(jnp.float32)
    for (w_pad, b_pad), cfg in zip(params, cfgs):
        y = _linear_relu(y, w_pad, b_pad, cfg)
    return y


# ----------------------------------------------------------------------------------
# DFF module (JAX/Pallas port, eval-mode forward)
# ----------------------------------------------------------------------------------
class DFF:
    EPS = 1e-5
    TM_CAP = 256                      # row-block cap (weights stay resident across i)
    TN = 512                          # lane-dense output tile
    W_TILE_BYTES = 4 * 1024 * 1024    # single-buffer bf16 weight-tile budget

    def __init__(self, cnn_seg_length, ms_n_mels, dropout, fc_out_h=4096, key=None):
        self.name = 'DFF'
        self.cnn_seg_length = cnn_seg_length
        self.ms_n_mels = ms_n_mels
        self.fan_in = cnn_seg_length * ms_n_mels
        self.fc_out_h = fc_out_h
        self.dropout_rate = dropout

        if key is None:
            key = jax.random.PRNGKey(0)
        ks = jax.random.split(key, 9)
        f32 = jnp.float32
        H, Fi = fc_out_h, self.fan_in

        def lin(kw, kb, n_out, n_in):
            w = (0.1 * jax.random.normal(kw, (n_out, n_in))).astype(f32)
            b = (0.1 * jax.random.normal(kb, (n_out,))).astype(f32)
            return w, b

        def bn(k, n):
            kg, kb, km, kv = jax.random.split(k, 4)
            g = (1.0 + 0.1 * jax.random.normal(kg, (n,))).astype(f32)
            b = (0.1 * jax.random.normal(kb, (n,))).astype(f32)
            m = (0.1 * jax.random.normal(km, (n,))).astype(f32)
            v = (0.5 + jax.random.uniform(kv, (n,))).astype(f32)
            return g, b, m, v

        self.lin1 = lin(*jax.random.split(ks[0]), H, Fi)
        self.lin2 = lin(*jax.random.split(ks[1]), H, H)
        self.lin3 = lin(*jax.random.split(ks[2]), H, H)
        self.lin4 = lin(*jax.random.split(ks[3]), H, H)
        self.bn1 = bn(ks[4], 1)     # BatchNorm2d(1) -> scalar affine
        self.bn2 = bn(ks[5], H)
        self.bn3 = bn(ks[6], H)
        self.bn4 = bn(ks[7], H)
        self.bn5 = bn(ks[8], H)

        self._params, self._cfgs = self._fold_params()

    @staticmethod
    def _bn_affine(bn_params, eps):
        g, b, m, v = bn_params
        scale = g / jnp.sqrt(v + eps)
        shift = b - m * scale
        return scale, shift

    def _fold_params(self):
        """Fold bn1 (input affine) and bn2..bn5 (post-linear affines) into the linears,
        transpose to (K, N), pad to tile multiples and cast weights to bf16 — all ONCE
        at init."""
        eps = self.EPS
        s1, c1 = self._bn_affine(self.bn1, eps)
        s1, c1 = s1[0], c1[0]
        w1, b1 = self.lin1
        w1f = w1 * s1                                   # bn1 scale folded in
        b1f = b1 + c1 * jnp.sum(w1, axis=1)             # bn1 shift folded in

        params, cfgs = [], []
        for (w, b), bn_post in zip(
                [(w1f, b1f), self.lin2, self.lin3, self.lin4],
                [self.bn2, self.bn3, self.bn4, self.bn5]):
            s, c = self._bn_affine(bn_post, eps)
            wf = (w * s[:, None]).T                     # (K, N), f32, BN folded
            bf = b * s + c                              # (N,),  f32, BN folded
            K, N = wf.shape

            # --- per-layer tile selection (static) -------------------------------
            Np0 = _round_up(N, 128)
            tn = min(self.TN, Np0)
            Np = _round_up(Np0, tn)
            Kp0 = _round_up(K, 128)
            max_tk = max(128, (self.W_TILE_BYTES // (tn * 2)) // 128 * 128)
            tk = Kp0 if Kp0 <= max_tk else max_tk       # single k step when it fits
            Kp = _round_up(Kp0, tk)

            # --- pad + cast once --------------------------------------------------
            w_pad = jnp.pad(wf, ((0, Kp - K), (0, Np - N))).astype(jnp.bfloat16)
            b_pad = jnp.pad(bf, (0, Np - N)).reshape(1, Np).astype(jnp.float32)

            params.append((w_pad, b_pad))
            cfgs.append((K, N, Kp, Np, self.TM_CAP, tn, tk))
        return tuple(params), tuple(cfgs)

    def __call__(self, x):
        """x: (B, 1, cnn_seg_length, ms_n_mels) f32 -> (B, fc_out_h) f32."""
        return _dff_forward(x, self._params, self._cfgs)


# ----------------------------------------------------------------------------------
# Pure-JAX reference (mirrors the PyTorch eval-mode forward, f32, no folding)
# ----------------------------------------------------------------------------------
def _reference(x, model):
    eps = DFF.EPS
    g, b, m, v = model.bn1
    y = g[0] * (x - m[0]) / jnp.sqrt(v[0] + eps) + b[0]
    y = y.reshape(-1, model.fan_in)
    for (w, bias), bn in zip([model.lin1, model.lin2, model.lin3, model.lin4],
                             [model.bn2, model.bn3, model.bn4, model.bn5]):
        y = y @ w.T + bias
        g2, b2, m2, v2 = bn
        y = g2 * (y - m2) / jnp.sqrt(v2 + eps) + b2
        y = jnp.maximum(y, 0.0)
    return y


if __name__ == "__main__":
    B, seg, mels, H = 6, 4, 8, 64          # small shapes: fan_in = 32, fc_out_h = 64
    key = jax.random.PRNGKey(0)
    kx, kp = jax.random.split(key)
    x = jax.random.normal(kx, (B, 1, seg, mels), dtype=jnp.float32)

    model = DFF(cnn_seg_length=seg, ms_n_mels=mels, dropout=0.2, fc_out_h=H, key=kp)
    out = jax.block_until_ready(model(x))

    ref = _reference(x, model)
    assert out.shape == (B, H), out.shape
    # bf16 weight/activation datapath (f32 accumulate) -> looser tolerance vs f32 ref.
    denom = jnp.maximum(jnp.max(jnp.abs(ref)), 1.0)
    max_rel = float(jnp.max(jnp.abs(out - ref)) / denom)
    assert max_rel < 3e-2, f"max relative error {max_rel}"
    print("KERNEL_OK")
</pallas_src>

<mosaic_0001>
module attributes {stable_mosaic.version = 11 : i64} {
  func.func @_linear_relu_kernel(%arg0: i32, %arg1: i32, %arg2: i32, %arg3: memref<8x128xbf16, #tpu.memory_space<vmem>>, %arg4: memref<128x128xbf16, #tpu.memory_space<vmem>>, %arg5: memref<1x128xf32, #tpu.memory_space<vmem>>, %arg6: memref<8x128xf32, #tpu.memory_space<vmem>>) attributes {dimension_semantics = [#tpu.dimension_semantics<parallel>, #tpu.dimension_semantics<parallel>, #tpu.dimension_semantics<arbitrary>], iteration_bounds = array<i64: 1, 1, 1>, scalar_prefetch = 0 : i64, scratch_operands = 0 : i64, tpu.core_type = #tpu.core_type<tc>, window_params = [{transform_indices = @transform_0, window_bounds = array<i64: 8, 128>}, {transform_indices = @transform_1, window_bounds = array<i64: 128, 128>}, {transform_indices = @transform_2, window_bounds = array<i64: 1, 128>}, {transform_indices = @transform_3, window_bounds = array<i64: 8, 128>}]} {
    %c0_i32 = arith.constant 0 : i32
    %0 = arith.cmpi eq, %arg2, %c0_i32 : i32
    %1 = arith.extui %0 : i1 to i32
    %c0_i32_0 = arith.constant 0 : i32
    %2 = arith.cmpi ne, %1, %c0_i32_0 : i32
    scf.if %2 {
      %cst_10 = arith.constant 0.000000e+00 : f32
      %12 = vector.broadcast %cst_10 : f32 to vector<8x128xf32>
      %c0_11 = arith.constant 0 : index
      %c0_12 = arith.constant 0 : index
      %13 = vector.load %arg6[%c0_11, %c0_12] : memref<8x128xf32, #tpu.memory_space<vmem>>, vector<8x128xf32>
      tpu.vector_store %arg6[%c0_11, %c0_12], %12 {strides = array<i32>} : memref<8x128xf32, #tpu.memory_space<vmem>>, vector<8x128xf32>,
    } else {
    }
    %c0 = arith.constant 0 : index
    %c0_1 = arith.constant 0 : index
    %3 = vector.load %arg6[%c0, %c0_1] : memref<8x128xf32, #tpu.memory_space<vmem>>, vector<8x128xf32>
    %c0_2 = arith.constant 0 : index
    %c0_3 = arith.constant 0 : index
    %4 = vector.load %arg3[%c0_2, %c0_3] : memref<8x128xbf16, #tpu.memory_space<vmem>>, vector<8x128xbf16>
    %c0_4 = arith.constant 0 : index
    %c0_5 = arith.constant 0 : index
    %5 = vector.load %arg4[%c0_4, %c0_5] : memref<128x128xbf16, #tpu.memory_space<vmem>>, vector<128x128xbf16>
    %cst = arith.constant dense<0.000000e+00> : vector<8x128xf32>
    %6 = tpu.matmul %4, %5, %cst {dimension_numbers = #tpu.dot_dimension_numbers<[1], [0], [0], [1], [0, 0, 1, 1], [], []>} : vector<8x128xbf16>, vector<128x128xbf16>, vector<8x128xf32> -> vector<8x128xf32>
    %7 = arith.addf %3, %6 : vector<8x128xf32>
    %c0_6 = arith.constant 0 : index
    %c0_7 = arith.constant 0 : index
    %8 = vector.load %arg6[%c0_6, %c0_7] : memref<8x128xf32, #tpu.memory_space<vmem>>, vector<8x128xf32>
    tpu.vector_store %arg6[%c0_6, %c0_7], %7 {strides = array<i32>} : memref<8x128xf32, #tpu.memory_space<vmem>>, vector<8x128xf32>,
    %c0_i32_8 = arith.constant 0 : i32
    %9 = arith.cmpi eq, %arg2, %c0_i32_8 : i32
    %10 = arith.extui %9 : i1 to i32
    %c0_i32_9 = arith.constant 0 : i32
    %11 = arith.cmpi ne, %10, %c0_i32_9 : i32
    scf.if %11 {
      %c0_10 = arith.constant 0 : index
      %c0_11 = arith.constant 0 : index
      %12 = vector.load %arg6[%c0_10, %c0_11] : memref<8x128xf32, #tpu.memory_space<vmem>>, vector<8x128xf32>
      %c0_12 = arith.constant 0 : index
      %c0_13 = arith.constant 0 : index
      %13 = vector.load %arg5[%c0_12, %c0_13] : memref<1x128xf32, #tpu.memory_space<vmem>>, vector<1x128xf32>
      %14 = vector.broadcast %13 : vector<1x128xf32> to vector<8x128xf32>
      %15 = arith.addf %12, %14 : vector<8x128xf32>
      %cst_14 = arith.constant 0.000000e+00 : f32
      %16 = vector.broadcast %cst_14 : f32 to vector<8x128xf32>
      %17 = arith.maximumf %15, %16 : vector<8x128xf32>
      %c0_15 = arith.constant 0 : index
      %c0_16 = arith.constant 0 : index
      %18 = vector.load %arg6[%c0_15, %c0_16] : memref<8x128xf32, #tpu.memory_space<vmem>>, vector<8x128xf32>
      tpu.vector_store %arg6[%c0_15, %c0_16], %17 {strides = array<i32>} : memref<8x128xf32, #tpu.memory_space<vmem>>, vector<8x128xf32>,
    } else {
    }
    return
  }
  func.func @transform_0(%arg0: i32, %arg1: i32, %arg2: i32) -> (i32, i32) {
    %c0_i32 = arith.constant 0 : i32
    return %arg1, %arg2 : i32, i32
  }
  func.func @transform_1(%arg0: i32, %arg1: i32, %arg2: i32) -> (i32, i32) {
    %c0_i32 = arith.constant 0 : i32
    return %arg2, %arg0 : i32, i32
  }
  func.func @transform_2(%arg0: i32, %arg1: i32, %arg2: i32) -> (i32, i32) {
    %c0_i32 = arith.constant 0 : i32
    %c0_i32_0 = arith.constant 0 : i32
    return %c0_i32, %arg0 : i32, i32
  }
  func.func @transform_3(%arg0: i32, %arg1: i32, %arg2: i32) -> (i32, i32) {
    %c0_i32 = arith.constant 0 : i32
    return %arg1, %arg0 : i32, i32
  }
}

module attributes {stable_mosaic.version = 11 : i64} {
  func.func @_linear_relu_kernel(%arg0: i32, %arg1: i32, %arg2: i32, %arg3: memref<8x128xbf16, #tpu.memory_space<vmem>>, %arg4: memref<128x128xbf16, #tpu.memory_space<vmem>>, %arg5: memref<1x128xf32, #tpu.memory_space<vmem>>, %arg6: memref<8x128xf32, #tpu.memory_space<vmem>>) attributes {dimension_semantics = [#tpu.dimension_semantics<parallel>, #tpu.dimension_semantics<parallel>, #tpu.dimension_semantics<arbitrary>], iteration_bounds = array<i64: 1, 1, 1>, scalar_prefetch = 0 : i64, scratch_operands = 0 : i64, tpu.core_type = #tpu.core_type<tc>, window_params = [{transform_indices = @transform_0, window_bounds = array<i64: 8, 128>}, {transform_indices = @transform_1, window_bounds = array<i64: 128, 128>}, {transform_indices = @transform_2, window_bounds = array<i64: 1, 128>}, {transform_indices = @transform_3, window_bounds = array<i64: 8, 128>}]} {
    %c0_i32 = arith.constant 0 : i32
    %0 = arith.cmpi eq, %arg2, %c0_i32 : i32
    %1 = arith.extui %0 : i1 to i32
    %c0_i32_0 = arith.constant 0 : i32
    %2 = arith.cmpi ne, %1, %c0_i32_0 : i32
    scf.if %2 {
      %cst_10 = arith.constant 0.000000e+00 : f32
      %12 = vector.broadcast %cst_10 : f32 to vector<8x128xf32>
      %c0_11 = arith.constant 0 : index
      %c0_12 = arith.constant 0 : index
      %13 = vector.load %arg6[%c0_11, %c0_12] : memref<8x128xf32, #tpu.memory_space<vmem>>, vector<8x128xf32>
      tpu.vector_store %arg6[%c0_11, %c0_12], %12 {strides = array<i32>} : memref<8x128xf32, #tpu.memory_space<vmem>>, vector<8x128xf32>,
    } else {
    }
    %c0 = arith.constant 0 : index
    %c0_1 = arith.constant 0 : index
    %3 = vector.load %arg6[%c0, %c0_1] : memref<8x128xf32, #tpu.memory_space<vmem>>, vector<8x128xf32>
    %c0_2 = arith.constant 0 : index
    %c0_3 = arith.constant 0 : index
    %4 = vector.load %arg3[%c0_2, %c0_3] : memref<8x128xbf16, #tpu.memory_space<vmem>>, vector<8x128xbf16>
    %c0_4 = arith.constant 0 : index
    %c0_5 = arith.constant 0 : index
    %5 = vector.load %arg4[%c0_4, %c0_5] : memref<128x128xbf16, #tpu.memory_space<vmem>>, vector<128x128xbf16>
    %cst = arith.constant dense<0.000000e+00> : vector<8x128xf32>
    %6 = tpu.matmul %4, %5, %cst {dimension_numbers = #tpu.dot_dimension_numbers<[1], [0], [0], [1], [0, 0, 1, 1], [], []>} : vector<8x128xbf16>, vector<128x128xbf16>, vector<8x128xf32> -> vector<8x128xf32>
    %7 = arith.addf %3, %6 : vector<8x128xf32>
    %c0_6 = arith.constant 0 : index
    %c0_7 = arith.constant 0 : index
    %8 = vector.load %arg6[%c0_6, %c0_7] : memref<8x128xf32, #tpu.memory_space<vmem>>, vector<8x128xf32>
    tpu.vector_store %arg6[%c0_6, %c0_7], %7 {strides = array<i32>} : memref<8x128xf32, #tpu.memory_space<vmem>>, vector<8x128xf32>,
    %c0_i32_8 = arith.constant 0 : i32
    %9 = arith.cmpi eq, %arg2, %c0_i32_8 : i32
    %10 = arith.extui %9 : i1 to i32
    %c0_i32_9 = arith.constant 0 : i32
    %11 = arith.cmpi ne, %10, %c0_i32_9 : i32
    scf.if %11 {
      %c0_10 = arith.constant 0 : index
      %c0_11 = arith.constant 0 : index
      %12 = vector.load %arg6[%c0_10, %c0_11] : memref<8x128xf32, #tpu.memory_space<vmem>>, vector<8x128xf32>
      %c0_12 = arith.constant 0 : index
      %c0_13 = arith.constant 0 : index
      %13 = vector.load %arg5[%c0_12, %c0_13] : memref<1x128xf32, #tpu.memory_space<vmem>>, vector<1x128xf32>
      %14 = vector.broadcast %13 : vector<1x128xf32> to vector<8x128xf32>
      %15 = arith.addf %12, %14 : vector<8x128xf32>
      %cst_14 = arith.constant 0.000000e+00 : f32
      %16 = vector.broadcast %cst_14 : f32 to vector<8x128xf32>
      %17 = arith.maximumf %15, %16 : vector<8x128xf32>
      %c0_15 = arith.constant 0 : index
      %c0_16 = arith.constant 0 : index
      %18 = vector.load %arg6[%c0_15, %c0_16] : memref<8x128xf32, #tpu.memory_space<vmem>>, vector<8x128xf32>
      tpu.vector_store %arg6[%c0_15, %c0_16], %17 {strides = array<i32>} : memref<8x128xf32, #tpu.memory_space<vmem>>, vector<8x128xf32>,
    } else {
    }
    return
  }
  func.func @transform_0(%arg0: i32, %arg1: i32, %arg2: i32) -> (i32, i32) {
    %c0_i32 = arith.constant 0 : i32
    return %arg1, %arg2 : i32, i32
  }
  func.func @transform_1(%arg0: i32, %arg1: i32, %arg2: i32) -> (i32, i32) {
    %c0_i32 = arith.constant 0 : i32
    return %arg2, %arg0 : i32, i32
  }
  func.func @transform_2(%arg0: i32, %arg1: i32, %arg2: i32) -> (i32, i32) {
    %c0_i32 = arith.constant 0 : i32
    %c0_i32_0 = arith.constant 0 : i32
    return %c0_i32, %arg0 : i32, i32
  }
  func.func @transform_3(%arg0: i32, %arg1: i32, %arg2: i32) -> (i32, i32) {
    %c0_i32 = arith.constant 0 : i32
    return %arg1, %arg0 : i32, i32
  }
}

module attributes {stable_mosaic.version = 11 : i64} {
  func.func @_linear_relu_kernel(%arg0: i32, %arg1: i32, %arg2: i32, %arg3: memref<8x128xbf16, #tpu.memory_space<vmem>>, %arg4: memref<128x128xbf16, #tpu.memory_space<vmem>>, %arg5: memref<1x128xf32, #tpu.memory_space<vmem>>, %arg6: memref<8x128xf32, #tpu.memory_space<vmem>>) attributes {dimension_semantics = [#tpu.dimension_semantics<parallel>, #tpu.dimension_semantics<parallel>, #tpu.dimension_semantics<arbitrary>], iteration_bounds = array<i64: 1, 1, 1>, scalar_prefetch = 0 : i64, scratch_operands = 0 : i64, tpu.core_type = #tpu.core_type<tc>, window_params = [{transform_indices = @transform_0, window_bounds = array<i64: 8, 128>}, {transform_indices = @transform_1, window_bounds = array<i64: 128, 128>}, {transform_indices = @transform_2, window_bounds = array<i64: 1, 128>}, {transform_indices = @transform_3, window_bounds = array<i64: 8, 128>}]} {
    %c0_i32 = arith.constant 0 : i32
    %0 = arith.cmpi eq, %arg2, %c0_i32 : i32
    %1 = arith.extui %0 : i1 to i32
    %c0_i32_0 = arith.constant 0 : i32
    %2 = arith.cmpi ne, %1, %c0_i32_0 : i32
    scf.if %2 {
      %cst_10 = arith.constant 0.000000e+00 : f32
      %12 = vector.broadcast %cst_10 : f32 to vector<8x128xf32>
      %c0_11 = arith.constant 0 : index
      %c0_12 = arith.constant 0 : index
      %13 = vector.load %arg6[%c0_11, %c0_12] : memref<8x128xf32, #tpu.memory_space<vmem>>, vector<8x128xf32>
      tpu.vector_store %arg6[%c0_11, %c0_12], %12 {strides = array<i32>} : memref<8x128xf32, #tpu.memory_space<vmem>>, vector<8x128xf32>,
    } else {
    }
    %c0 = arith.constant 0 : index
    %c0_1 = arith.constant 0 : index
    %3 = vector.load %arg6[%c0, %c0_1] : memref<8x128xf32, #tpu.memory_space<vmem>>, vector<8x128xf32>
    %c0_2 = arith.constant 0 : index
    %c0_3 = arith.constant 0 : index
    %4 = vector.load %arg3[%c0_2, %c0_3] : memref<8x128xbf16, #tpu.memory_space<vmem>>, vector<8x128xbf16>
    %c0_4 = arith.constant 0 : index
    %c0_5 = arith.constant 0 : index
    %5 = vector.load %arg4[%c0_4, %c0_5] : memref<128x128xbf16, #tpu.memory_space<vmem>>, vector<128x128xbf16>
    %cst = arith.constant dense<0.000000e+00> : vector<8x128xf32>
    %6 = tpu.matmul %4, %5, %cst {dimension_numbers = #tpu.dot_dimension_numbers<[1], [0], [0], [1], [0, 0, 1, 1], [], []>} : vector<8x128xbf16>, vector<128x128xbf16>, vector<8x128xf32> -> vector<8x128xf32>
    %7 = arith.addf %3, %6 : vector<8x128xf32>
    %c0_6 = arith.constant 0 : index
    %c0_7 = arith.constant 0 : index
    %8 = vector.load %arg6[%c0_6, %c0_7] : memref<8x128xf32, #tpu.memory_space<vmem>>, vector<8x128xf32>
    tpu.vector_store %arg6[%c0_6, %c0_7], %7 {strides = array<i32>} : memref<8x128xf32, #tpu.memory_space<vmem>>, vector<8x128xf32>,
    %c0_i32_8 = arith.constant 0 : i32
    %9 = arith.cmpi eq, %arg2, %c0_i32_8 : i32
    %10 = arith.extui %9 : i1 to i32
    %c0_i32_9 = arith.constant 0 : i32
    %11 = arith.cmpi ne, %10, %c0_i32_9 : i32
    scf.if %11 {
      %c0_10 = arith.constant 0 : index
      %c0_11 = arith.constant 0 : index
      %12 = vector.load %arg6[%c0_10, %c0_11] : memref<8x128xf32, #tpu.memory_space<vmem>>, vector<8x128xf32>
      %c0_12 = arith.constant 0 : index
      %c0_13 = arith.constant 0 : index
      %13 = vector.load %arg5[%c0_12, %c0_13] : memref<1x128xf32, #tpu.memory_space<vmem>>, vector<1x128xf32>
      %14 = vector.broadcast %13 : vector<1x128xf32> to vector<8x128xf32>
      %15 = arith.addf %12, %14 : vector<8x128xf32>
      %cst_14 = arith.constant 0.000000e+00 : f32
      %16 = vector.broadcast %cst_14 : f32 to vector<8x128xf32>
      %17 = arith.maximumf %15, %16 : vector<8x128xf32>
      %c0_15 = arith.constant 0 : index
      %c0_16 = arith.constant 0 : index
      %18 = vector.load %arg6[%c0_15, %c0_16] : memref<8x128xf32, #tpu.memory_space<vmem>>, vector<8x128xf32>
      tpu.vector_store %arg6[%c0_15, %c0_16], %17 {strides = array<i32>} : memref<8x128xf32, #tpu.memory_space<vmem>>, vector<8x128xf32>,
    } else {
    }
    return
  }
  func.func @transform_0(%arg0: i32, %arg1: i32, %arg2: i32) -> (i32, i32) {
    %c0_i32 = arith.constant 0 : i32
    return %arg1, %arg2 : i32, i32
  }
  func.func @transform_1(%arg0: i32, %arg1: i32, %arg2: i32) -> (i32, i32) {
    %c0_i32 = arith.constant 0 : i32
    return %arg2, %arg0 : i32, i32
  }
  func.func @transform_2(%arg0: i32, %arg1: i32, %arg2: i32) -> (i32, i32) {
    %c0_i32 = arith.constant 0 : i32
    %c0_i32_0 = arith.constant 0 : i32
    return %c0_i32, %arg0 : i32, i32
  }
  func.func @transform_3(%arg0: i32, %arg1: i32, %arg2: i32) -> (i32, i32) {
    %c0_i32 = arith.constant 0 : i32
    return %arg1, %arg0 : i32, i32
  }
}

</mosaic_0001>

<llo_original>
// kernel: _dff_forward.4
$region0: #{_dff_forward.4}
  #allocation0 [shape = 'u32[]', space=smem, size = 0x4, offset = 0x4, fixed_abs, tag = 'smem constant byte address 0x4 - core index']
  #allocation1 [shape = 'u32[144,128]{1,0:T(1,128)}', space=vmem, size = 0x12000, scoped, tag = 'internal scratch']
  %s0 = inlined_call_operand.vmem [shape: bf16[8,128], index: 0, kind: input, shape index: {}]
  %s1 = inlined_call_operand.hbm [shape: bf16[128,128], index: 1, kind: input, shape index: {}]
  %s2 = inlined_call_operand.vmem [shape: f32[1,128], index: 2, kind: input, shape index: {}]
  %s3 = inlined_call_operand.vmem [shape: f32[8,128], index: 3, kind: output, shape index: {}]
  %s4 = sld [smem:[#allocation0]]
  $region34: #{_dff_forward.4} parent=0
    _
  %s6 = ssub.s32 1, %s4
  %s7 = scalar_select 0, %s6, %s4
  $region1: #{_dff_forward.4} parent=0
    #allocation2 [shape = 'u8[32768]{0}', space=vmem, size = 0x8000, scoped, tag = 'input window, operand 1, single buffered']
    #allocation3 [shape = 's32[1]{0}', space=sflag, size = 0x4, scoped, tag = 'scoped memory for _dff_forward.4']
    %8 = vsyncpa [#allocation3], 0
    // Predicated region
    $region2: #{_dff_forward.4} parent=1 // pred_check
      _
    $region3: #{_dff_forward.4} parent=1 // pred_check_branch
      %10 = sbr.rel (0) target = $region5
    $region4: #{_dff_forward.4} parent=1 // pred_region
      _
    $region5: #{_dff_forward.4} parent=1 // pred_fallthru
      _
    // Predicated region
    $region6: #{_dff_forward.4} parent=1 // pred_check
      _
    $region7: #{_dff_forward.4} parent=1 // pred_check_branch
      %12 = sbr.rel (0) target = $region9
    $region8: #{_dff_forward.4} parent=1 // pred_region
      %s14 = ssub.s32 1024, 1024
      %15 = vsyncadd [#allocation3], %s14
      %s16 = sshll.u32 [#allocation2], 4
      %s17 = int_to_ptr.vmem [resolvable:$true] %s16
      %22 = dma.hbm_to_vmem [thread:$0]  %s1, 1024, %s17, [#allocation3], 64, 64, 4
    $region9: #{_dff_forward.4} parent=1 // pred_fallthru
      _
    // Predicated region
    $region10: #{_dff_forward.4} parent=1 // pred_check
      _
    $region11: #{_dff_forward.4} parent=1 // pred_check_branch
      %24 = sbr.rel (0) target = $region13
    $region12: #{_dff_forward.4} parent=1 // pred_region
      _
    $region13: #{_dff_forward.4} parent=1 // pred_fallthru
      _
    // Predicated region
    $region14: #{_dff_forward.4} parent=1 // pred_check
      _
    $region15: #{_dff_forward.4} parent=1 // pred_check_branch
      %26 = sbr.rel (0) target = $region17
    $region16: #{_dff_forward.4} parent=1 // pred_region
      %27 = dma.done [#allocation3], 1024
    $region17: #{_dff_forward.4} parent=1 // pred_fallthru
      _
    %p29 = scmp.eq.s32.totalorder 0, 0
    // Predicated region
    $region18: #{_dff_forward.4} parent=1 // pred_check
      %p30 = pneg %p29
    $region19: #{_dff_forward.4} parent=1 // pred_check_branch
      %32 = sbr.rel (%p30) target = $region21
    $region20: #{_dff_forward.4} parent=1 // pred_region
      %33 = vst [vmem:[%s3] sm:$0xff] 0.0
    $region21: #{_dff_forward.4} parent=1 // pred_fallthru
      _
    %v34 = vld [vmem:[%s3] sm:$0xff]
    %v35 = vld [vmem:[%s0] sm:$0xf]
    %v36 = vld [vmem:[#allocation2] sm:$0xf]
    %v37 = vld [vmem:[#allocation2 + $0x4] sm:$0xf]
    %v38 = vld [vmem:[#allocation2 + $0x8] sm:$0xf]
    %v39 = vld [vmem:[#allocation2 + $0xc] sm:$0xf]
    %v40 = vld [vmem:[#allocation2 + $0x10] sm:$0xf]
    %v41 = vld [vmem:[#allocation2 + $0x14] sm:$0xf]
    %v42 = vld [vmem:[#allocation2 + $0x18] sm:$0xf]
    %v43 = vld [vmem:[#allocation2 + $0x1c] sm:$0xf]
    %v44 = vld [vmem:[#allocation2 + $0x20] sm:$0xf]
    %v45 = vld [vmem:[#allocation2 + $0x24] sm:$0xf]
    %v46 = vld [vmem:[#allocation2 + $0x28] sm:$0xf]
    %v47 = vld [vmem:[#allocation2 + $0x2c] sm:$0xf]
    %v48 = vld [vmem:[#allocation2 + $0x30] sm:$0xf]
    %v49 = vld [vmem:[#allocation2 + $0x34] sm:$0xf]
    %v50 = vld [vmem:[#allocation2 + $0x38] sm:$0xf]
    %v51 = vld [vmem:[#allocation2 + $0x3c] sm:$0xf]
    %v68 = vunpack.c.l.b16 %v36
    %v69 = vunpack.c.l.b16 %v37
    %v70 = vunpack.c.l.b16 %v38
    %v71 = vunpack.c.l.b16 %v39
    %v72 = vunpack.c.l.b16 %v40
    %v73 = vunpack.c.l.b16 %v41
    %v74 = vunpack.c.l.b16 %v42
    %v75 = vunpack.c.l.b16 %v43
    %v76 = vunpack.c.l.b16 %v44
    %v77 = vunpack.c.l.b16 %v45
    %v78 = vunpack.c.l.b16 %v46
    %v79 = vunpack.c.l.b16 %v47
    %v80 = vunpack.c.l.b16 %v48
    %v81 = vunpack.c.l.b16 %v49
    %v82 = vunpack.c.l.b16 %v50
    %v83 = vunpack.c.l.b16 %v51
    %v84 = vpack.c.b16 %v69, %v68
    %v85 = vpack.c.b16 %v71, %v70
    %v86 = vpack.c.b16 %v73, %v72
    %v87 = vpack.c.b16 %v75, %v74
    %v88 = vpack.c.b16 %v77, %v76
    %v89 = vpack.c.b16 %v79, %v78
    %v90 = vpack.c.b16 %v81, %v80
    %v91 = vpack.c.b16 %v83, %v82
    %100 = vmatprep.subr.bf16.mxu0 0
    %101 = vmatpush1.bf16.msra.mxu0 %v91
    %102 = vmatprep.subr.bf16.mxu0 0
    %103 = vmatpush1.bf16.msra.mxu0 %v90
    %104 = vmatprep.subr.bf16.mxu0 0
    %105 = vmatpush1.bf16.msra.mxu0 %v89
    %106 = vmatprep.subr.bf16.mxu0 0
    %107 = vmatpush1.bf16.msra.mxu0 %v88
    %108 = vmatprep.subr.bf16.mxu0 0
    %109 = vmatpush1.bf16.msra.mxu0 %v87
    %110 = vmatprep.subr.bf16.mxu0 0
    %111 = vmatpush1.bf16.msra.mxu0 %v86
    %112 = vmatprep.subr.bf16.mxu0 0
    %113 = vmatpush1.bf16.msra.mxu0 %v85
    %114 = vmatprep.subr.bf16.mxu0 0
    %115 = vmatpush1.bf16.msra.mxu0 %v84
    %116 = vmatprep.subr.bf16.mxu0 0
    %117 = vmatpush2.bf16.msra.mxu0 0
    %118 = vmatprep.subr.bf16.mxu0 0
    %119 = vmatpush2.bf16.msra.mxu0 0
    %120 = vmatprep.subr.bf16.mxu0 0
    %121 = vmatpush2.bf16.msra.mxu0 0
    %122 = vmatprep.subr.bf16.mxu0 0
    %123 = vmatpush2.bf16.msra.mxu0 0
    %124 = vmatprep.subr.bf16.mxu0 0
    %125 = vmatpush2.bf16.msra.mxu0 0
    %126 = vmatprep.subr.bf16.mxu0 0
    %127 = vmatpush2.bf16.msra.mxu0 0
    %128 = vmatprep.subr.bf16.mxu0 0
    %129 = vmatpush2.bf16.msra.mxu0 0
    %130 = vmatprep.subr.bf16.mxu0 0
    %131 = vmatpush2.bf16.msra.mxu0 0
    %132 = vmatprep.mubr.bf16.mxu0 0
    %133 = vmatmul.mubr.bf16.gmra.mxu0 %v35
    %v134 = vpop.f32.mrf.mxu0
    %v135 = vadd.f32 0.0, %v134
    %v136 = vpop.f32.mrf.mxu0
    %v137 = vpop.f32.mrf.mxu0
    %v138 = vpop.f32.mrf.mxu0
    %139 = vdwg.mxu0
    %v140 = vadd.f32 %v34, %v135
    %141 = vst [vmem:[%s3] sm:$0xff] %v140
    // Predicated region
    $region22: #{_dff_forward.4} parent=1 // pred_check
      %p142 = pneg %p29
    $region23: #{_dff_forward.4} parent=1 // pred_check_branch
      %144 = sbr.rel (%p142) target = $region25
    $region24: #{_dff_forward.4} parent=1 // pred_region
      %v145 = vld [vmem:[%s3] sm:$0xff]
      %v146 = vld [vmem:[%s2] sm:$0x1]
      %v148 = vlaneseq
      %v149 = vshrl.u32 %v148, 7
      %v150 = vsub.s32 0, %v149
      %v151 = vrot.slane %v146, %v150
      %v153 = vadd.f32 %v145, %v151
      %v154 = vmax.f32 %v153, 0.0
      %155 = vst [vmem:[%s3] sm:$0xff] %v154
    $region25: #{_dff_forward.4} parent=1 // pred_fallthru
      _
    // Predicated region
    $region26: #{_dff_forward.4} parent=1 // pred_check
      _
    $region27: #{_dff_forward.4} parent=1 // pred_check_branch
      %157 = sbr.rel (0) target = $region29
    $region28: #{_dff_forward.4} parent=1 // pred_region
      _
    $region29: #{_dff_forward.4} parent=1 // pred_fallthru
      _
    // Predicated region
    $region30: #{_dff_forward.4} parent=1 // pred_check
      _
    $region31: #{_dff_forward.4} parent=1 // pred_check_branch
      %159 = sbr.rel (0) target = $region33
    $region32: #{_dff_forward.4} parent=1 // pred_region
      _
    $region33: #{_dff_forward.4} parent=1 // pred_fallthru
      _
    %160 = vsyncpa [#allocation3], 1

// kernel: _dff_forward.5
$region0: #{_dff_forward.5}
  #allocation0 [shape = 'u32[]', space=smem, size = 0x4, offset = 0x4, fixed_abs, tag = 'smem constant byte address 0x4 - core index']
  #allocation1 [shape = 'u32[144,128]{1,0:T(1,128)}', space=vmem, size = 0x12000, scoped, tag = 'internal scratch']
  %s0 = inlined_call_operand.vmem [shape: bf16[8,128], index: 0, kind: input, shape index: {}]
  %s1 = inlined_call_operand.vmem [shape: bf16[128,128], index: 1, kind: input, shape index: {}]
  %s2 = inlined_call_operand.vmem [shape: f32[1,128], index: 2, kind: input, shape index: {}]
  %s3 = inlined_call_operand.vmem [shape: f32[8,128], index: 3, kind: output, shape index: {}]
  %s4 = sld [smem:[#allocation0]]
  $region30: #{_dff_forward.5} parent=0
    _
  %s6 = ssub.s32 1, %s4
  %s7 = scalar_select 0, %s6, %s4
  // Predicated region
  $region2: #{_dff_forward.5} parent=0 // pred_check
    _
  $region3: #{_dff_forward.5} parent=0 // pred_check_branch
    %9 = sbr.rel (0) target = $region5
  $region4: #{_dff_forward.5} parent=0 // pred_region
    _
  $region5: #{_dff_forward.5} parent=0 // pred_fallthru
    _
  // Predicated region
  $region6: #{_dff_forward.5} parent=0 // pred_check
    _
  $region7: #{_dff_forward.5} parent=0 // pred_check_branch
    %11 = sbr.rel (0) target = $region9
  $region8: #{_dff_forward.5} parent=0 // pred_region
    _
  $region9: #{_dff_forward.5} parent=0 // pred_fallthru
    _
  // Predicated region
  $region10: #{_dff_forward.5} parent=0 // pred_check
    _
  $region11: #{_dff_forward.5} parent=0 // pred_check_branch
    %13 = sbr.rel (0) target = $region13
  $region12: #{_dff_forward.5} parent=0 // pred_region
    _
  $region13: #{_dff_forward.5} parent=0 // pred_fallthru
    _
  %p15 = scmp.eq.s32.totalorder 0, 0
  // Predicated region
  $region14: #{_dff_forward.5} parent=0 // pred_check
    %p16 = pneg %p15
  $region15: #{_dff_forward.5} parent=0 // pred_check_branch
    %18 = sbr.rel (%p16) target = $region17
  $region16: #{_dff_forward.5} parent=0 // pred_region
    %19 = vst [vmem:[%s3] sm:$0xff] 0.0
  $region17: #{_dff_forward.5} parent=0 // pred_fallthru
    _
  %v20 = vld [vmem:[%s3] sm:$0xff]
  %v21 = vld [vmem:[%s0] sm:$0xf]
  %v22 = vld [vmem:[%s1] sm:$0xf]
  %v23 = vld [vmem:[%s1 + $0x4] sm:$0xf]
  %v24 = vld [vmem:[%s1 + $0x8] sm:$0xf]
  %v25 = vld [vmem:[%s1 + $0xc] sm:$0xf]
  %v26 = vld [vmem:[%s1 + $0x10] sm:$0xf]
  %v27 = vld [vmem:[%s1 + $0x14] sm:$0xf]
  %v28 = vld [vmem:[%s1 + $0x18] sm:$0xf]
  %v29 = vld [vmem:[%s1 + $0x1c] sm:$0xf]
  %v30 = vld [vmem:[%s1 + $0x20] sm:$0xf]
  %v31 = vld [vmem:[%s1 + $0x24] sm:$0xf]
  %v32 = vld [vmem:[%s1 + $0x28] sm:$0xf]
  %v33 = vld [vmem:[%s1 + $0x2c] sm:$0xf]
  %v34 = vld [vmem:[%s1 + $0x30] sm:$0xf]
  %v35 = vld [vmem:[%s1 + $0x34] sm:$0xf]
  %v36 = vld [vmem:[%s1 + $0x38] sm:$0xf]
  %v37 = vld [vmem:[%s1 + $0x3c] sm:$0xf]
  %v54 = vunpack.c.l.b16 %v22
  %v55 = vunpack.c.l.b16 %v23
  %v56 = vunpack.c.l.b16 %v24
  %v57 = vunpack.c.l.b16 %v25
  %v58 = vunpack.c.l.b16 %v26
  %v59 = vunpack.c.l.b16 %v27
  %v60 = vunpack.c.l.b16 %v28
  %v61 = vunpack.c.l.b16 %v29
  %v62 = vunpack.c.l.b16 %v30
  %v63 = vunpack.c.l.b16 %v31
  %v64 = vunpack.c.l.b16 %v32
  %v65 = vunpack.c.l.b16 %v33
  %v66 = vunpack.c.l.b16 %v34
  %v67 = vunpack.c.l.b16 %v35
  %v68 = vunpack.c.l.b16 %v36
  %v69 = vunpack.c.l.b16 %v37
  %v70 = vpack.c.b16 %v55, %v54
  %v71 = vpack.c.b16 %v57, %v56
  %v72 = vpack.c.b16 %v59, %v58
  %v73 = vpack.c.b16 %v61, %v60
  %v74 = vpack.c.b16 %v63, %v62
  %v75 = vpack.c.b16 %v65, %v64
  %v76 = vpack.c.b16 %v67, %v66
  %v77 = vpack.c.b16 %v69, %v68
  %86 = vmatprep.subr.bf16.mxu0 0
  %87 = vmatpush1.bf16.msra.mxu0 %v77
  %88 = vmatprep.subr.bf16.mxu0 0
  %89 = vmatpush1.bf16.msra.mxu0 %v76
  %90 = vmatprep.subr.bf16.mxu0 0
  %91 = vmatpush1.bf16.msra.mxu0 %v75
  %92 = vmatprep.subr.bf16.mxu0 0
  %93 = vmatpush1.bf16.msra.mxu0 %v74
  %94 = vmatprep.subr.bf16.mxu0 0
  %95 = vmatpush1.bf16.msra.mxu0 %v73
  %96 = vmatprep.subr.bf16.mxu0 0
  %97 = vmatpush1.bf16.msra.mxu0 %v72
  %98 = vmatprep.subr.bf16.mxu0 0
  %99 = vmatpush1.bf16.msra.mxu0 %v71
  %100 = vmatprep.subr.bf16.mxu0 0
  %101 = vmatpush1.bf16.msra.mxu0 %v70
  %102 = vmatprep.subr.bf16.mxu0 0
  %103 = vmatpush2.bf16.msra.mxu0 0
  %104 = vmatprep.subr.bf16.mxu0 0
  %105 = vmatpush2.bf16.msra.mxu0 0
  %106 = vmatprep.subr.bf16.mxu0 0
  %107 = vmatpush2.bf16.msra.mxu0 0
  %108 = vmatprep.subr.bf16.mxu0 0
  %109 = vmatpush2.bf16.msra.mxu0 0
  %110 = vmatprep.subr.bf16.mxu0 0
  %111 = vmatpush2.bf16.msra.mxu0 0
  %112 = vmatprep.subr.bf16.mxu0 0
  %113 = vmatpush2.bf16.msra.mxu0 0
  %114 = vmatprep.subr.bf16.mxu0 0
  %115 = vmatpush2.bf16.msra.mxu0 0
  %116 = vmatprep.subr.bf16.mxu0 0
  %117 = vmatpush2.bf16.msra.mxu0 0
  %118 = vmatprep.mubr.bf16.mxu0 0
  %119 = vmatmul.mubr.bf16.gmra.mxu0 %v21
  %v120 = vpop.f32.mrf.mxu0
  %v121 = vadd.f32 0.0, %v120
  %v122 = vpop.f32.mrf.mxu0
  %v123 = vpop.f32.mrf.mxu0
  %v124 = vpop.f32.mrf.mxu0
  %125 = vdwg.mxu0
  %v126 = vadd.f32 %v20, %v121
  %127 = vst [vmem:[%s3] sm:$0xff] %v126
  // Predicated region
  $region18: #{_dff_forward.5} parent=0 // pred_check
    %p128 = pneg %p15
  $region19: #{_dff_forward.5} parent=0 // pred_check_branch
    %130 = sbr.rel (%p128) target = $region21
  $region20: #{_dff_forward.5} parent=0 // pred_region
    %v131 = vld [vmem:[%s3] sm:$0xff]
    %v132 = vld [vmem:[%s2] sm:$0x1]
    %v134 = vlaneseq
    %v135 = vshrl.u32 %v134, 7
    %v136 = vsub.s32 0, %v135
    %v137 = vrot.slane %v132, %v136
    %v139 = vadd.f32 %v131, %v137
    %v140 = vmax.f32 %v139, 0.0
    %141 = vst [vmem:[%s3] sm:$0xff] %v140
  $region21: #{_dff_forward.5} parent=0 // pred_fallthru
    _
  // Predicated region
  $region22: #{_dff_forward.5} parent=0 // pred_check
    _
  $region23: #{_dff_forward.5} parent=0 // pred_check_branch
    %143 = sbr.rel (0) target = $region25
  $region24: #{_dff_forward.5} parent=0 // pred_region
    _
  $region25: #{_dff_forward.5} parent=0 // pred_fallthru
    _
  // Predicated region
  $region26: #{_dff_forward.5} parent=0 // pred_check
    _
  $region27: #{_dff_forward.5} parent=0 // pred_check_branch
    %145 = sbr.rel (0) target = $region29
  $region28: #{_dff_forward.5} parent=0 // pred_region
    _
  $region29: #{_dff_forward.5} parent=0 // pred_fallthru
    _

// kernel: _dff_forward.7
$region0: #{_dff_forward.7}
  #allocation0 [shape = 'u32[]', space=smem, size = 0x4, offset = 0x4, fixed_abs, tag = 'smem constant byte address 0x4 - core index']
  #allocation1 [shape = 'u32[144,128]{1,0:T(1,128)}', space=vmem, size = 0x12000, scoped, tag = 'internal scratch']
  %s0 = inlined_call_operand.vmem [shape: bf16[8,128], index: 0, kind: input, shape index: {}]
  %s1 = inlined_call_operand.vmem [shape: bf16[128,128], index: 1, kind: input, shape index: {}]
  %s2 = inlined_call_operand.vmem [shape: f32[1,128], index: 2, kind: input, shape index: {}]
  %s3 = inlined_call_operand.hbm [shape: f32[8,128], index: 3, kind: output, shape index: {}]
  %s4 = sld [smem:[#allocation0]]
  $region30: #{_dff_forward.7} parent=0
    _
  %s6 = ssub.s32 1, %s4
  %s7 = scalar_select 0, %s6, %s4
  $region1: #{_dff_forward.7} parent=0
    #allocation2 [shape = 'u8[4096]{0}', space=vmem, size = 0x1000, scoped, tag = 'output window, operand 0, single buffered']
    #allocation3 [shape = 's32[1]{0}', space=sflag, size = 0x4, scoped, tag = 'scoped memory for _dff_forward.7']
    %8 = vsyncpa [#allocation3], 0
    // Predicated region
    $region2: #{_dff_forward.7} parent=1 // pred_check
      _
    $region3: #{_dff_forward.7} parent=1 // pred_check_branch
      %10 = sbr.rel (0) target = $region5
    $region4: #{_dff_forward.7} parent=1 // pred_region
      _
    $region5: #{_dff_forward.7} parent=1 // pred_fallthru
      _
    // Predicated region
    $region6: #{_dff_forward.7} parent=1 // pred_check
      _
    $region7: #{_dff_forward.7} parent=1 // pred_check_branch
      %12 = sbr.rel (0) target = $region9
    $region8: #{_dff_forward.7} parent=1 // pred_region
      _
    $region9: #{_dff_forward.7} parent=1 // pred_fallthru
      _
    // Predicated region
    $region10: #{_dff_forward.7} parent=1 // pred_check
      _
    $region11: #{_dff_forward.7} parent=1 // pred_check_branch
      %14 = sbr.rel (0) target = $region13
    $region12: #{_dff_forward.7} parent=1 // pred_region
      _
    $region13: #{_dff_forward.7} parent=1 // pred_fallthru
      _
    %p16 = scmp.eq.s32.totalorder 0, 0
    // Predicated region
    $region14: #{_dff_forward.7} parent=1 // pred_check
      %p17 = pneg %p16
    $region15: #{_dff_forward.7} parent=1 // pred_check_branch
      %19 = sbr.rel (%p17) target = $region17
    $region16: #{_dff_forward.7} parent=1 // pred_region
      %20 = vst [vmem:[#allocation2] sm:$0xff] 0.0
    $region17: #{_dff_forward.7} parent=1 // pred_fallthru
      _
    %v21 = vld [vmem:[#allocation2] sm:$0xff]
    %v22 = vld [vmem:[%s0] sm:$0xf]
    %v23 = vld [vmem:[%s1] sm:$0xf]
    %v24 = vld [vmem:[%s1 + $0x4] sm:$0xf]
    %v25 = vld [vmem:[%s1 + $0x8] sm:$0xf]
    %v26 = vld [vmem:[%s1 + $0xc] sm:$0xf]
    %v27 = vld [vmem:[%s1 + $0x10] sm:$0xf]
    %v28 = vld [vmem:[%s1 + $0x14] sm:$0xf]
    %v29 = vld [vmem:[%s1 + $0x18] sm:$0xf]
    %v30 = vld [vmem:[%s1 + $0x1c] sm:$0xf]
    %v31 = vld [vmem:[%s1 + $0x20] sm:$0xf]
    %v32 = vld [vmem:[%s1 + $0x24] sm:$0xf]
    %v33 = vld [vmem:[%s1 + $0x28] sm:$0xf]
    %v34 = vld [vmem:[%s1 + $0x2c] sm:$0xf]
    %v35 = vld [vmem:[%s1 + $0x30] sm:$0xf]
    %v36 = vld [vmem:[%s1 + $0x34] sm:$0xf]
    %v37 = vld [vmem:[%s1 + $0x38] sm:$0xf]
    %v38 = vld [vmem:[%s1 + $0x3c] sm:$0xf]
    %v55 = vunpack.c.l.b16 %v23
    %v56 = vunpack.c.l.b16 %v24
    %v57 = vunpack.c.l.b16 %v25
    %v58 = vunpack.c.l.b16 %v26
    %v59 = vunpack.c.l.b16 %v27
    %v60 = vunpack.c.l.b16 %v28
    %v61 = vunpack.c.l.b16 %v29
    %v62 = vunpack.c.l.b16 %v30
    %v63 = vunpack.c.l.b16 %v31
    %v64 = vunpack.c.l.b16 %v32
    %v65 = vunpack.c.l.b16 %v33
    %v66 = vunpack.c.l.b16 %v34
    %v67 = vunpack.c.l.b16 %v35
    %v68 = vunpack.c.l.b16 %v36
    %v69 = vunpack.c.l.b16 %v37
    %v70 = vunpack.c.l.b16 %v38
    %v71 = vpack.c.b16 %v56, %v55
    %v72 = vpack.c.b16 %v58, %v57
    %v73 = vpack.c.b16 %v60, %v59
    %v74 = vpack.c.b16 %v62, %v61
    %v75 = vpack.c.b16 %v64, %v63
    %v76 = vpack.c.b16 %v66, %v65
    %v77 = vpack.c.b16 %v68, %v67
    %v78 = vpack.c.b16 %v70, %v69
    %87 = vmatprep.subr.bf16.mxu0 0
    %88 = vmatpush1.bf16.msra.mxu0 %v78
    %89 = vmatprep.subr.bf16.mxu0 0
    %90 = vmatpush1.bf16.msra.mxu0 %v77
    %91 = vmatprep.subr.bf16.mxu0 0
    %92 = vmatpush1.bf16.msra.mxu0 %v76
    %93 = vmatprep.subr.bf16.mxu0 0
    %94 = vmatpush1.bf16.msra.mxu0 %v75
    %95 = vmatprep.subr.bf16.mxu0 0
    %96 = vmatpush1.bf16.msra.mxu0 %v74
    %97 = vmatprep.subr.bf16.mxu0 0
    %98 = vmatpush1.bf16.msra.mxu0 %v73
    %99 = vmatprep.subr.bf16.mxu0 0
    %100 = vmatpush1.bf16.msra.mxu0 %v72
    %101 = vmatprep.subr.bf16.mxu0 0
    %102 = vmatpush1.bf16.msra.mxu0 %v71
    %103 = vmatprep.subr.bf16.mxu0 0
    %104 = vmatpush2.bf16.msra.mxu0 0
    %105 = vmatprep.subr.bf16.mxu0 0
    %106 = vmatpush2.bf16.msra.mxu0 0
    %107 = vmatprep.subr.bf16.mxu0 0
    %108 = vmatpush2.bf16.msra.mxu0 0
    %109 = vmatprep.subr.bf16.mxu0 0
    %110 = vmatpush2.bf16.msra.mxu0 0
    %111 = vmatprep.subr.bf16.mxu0 0
    %112 = vmatpush2.bf16.msra.mxu0 0
    %113 = vmatprep.subr.bf16.mxu0 0
    %114 = vmatpush2.bf16.msra.mxu0 0
    %115 = vmatprep.subr.bf16.mxu0 0
    %116 = vmatpush2.bf16.msra.mxu0 0
    %117 = vmatprep.subr.bf16.mxu0 0
    %118 = vmatpush2.bf16.msra.mxu0 0
    %119 = vmatprep.mubr.bf16.mxu0 0
    %120 = vmatmul.mubr.bf16.gmra.mxu0 %v22
    %v121 = vpop.f32.mrf.mxu0
    %v122 = vadd.f32 0.0, %v121
    %v123 = vpop.f32.mrf.mxu0
    %v124 = vpop.f32.mrf.mxu0
    %v125 = vpop.f32.mrf.mxu0
    %126 = vdwg.mxu0
    %v127 = vadd.f32 %v21, %v122
    %128 = vst [vmem:[#allocation2] sm:$0xff] %v127
    // Predicated region
    $region18: #{_dff_forward.7} parent=1 // pred_check
      %p129 = pneg %p16
    $region19: #{_dff_forward.7} parent=1 // pred_check_branch
      %131 = sbr.rel (%p129) target = $region21
    $region20: #{_dff_forward.7} parent=1 // pred_region
      %v132 = vld [vmem:[#allocation2] sm:$0xff]
      %v133 = vld [vmem:[%s2] sm:$0x1]
      %v135 = vlaneseq
      %v136 = vshrl.u32 %v135, 7
      %v137 = vsub.s32 0, %v136
      %v138 = vrot.slane %v133, %v137
      %v140 = vadd.f32 %v132, %v138
      %v141 = vmax.f32 %v140, 0.0
      %142 = vst [vmem:[#allocation2] sm:$0xff] %v141
    $region21: #{_dff_forward.7} parent=1 // pred_fallthru
      _
    // Predicated region
    $region22: #{_dff_forward.7} parent=1 // pred_check
      _
    $region23: #{_dff_forward.7} parent=1 // pred_check_branch
      %144 = sbr.rel (0) target = $region25
    $region24: #{_dff_forward.7} parent=1 // pred_region
      %s146 = ssub.s32 128, 128
      %147 = vsyncadd [#allocation3], %s146
      %s149 = sshll.u32 [#allocation2], 4
      %s150 = int_to_ptr.vmem [resolvable:$true] %s149
      %152 = dma.vmem_to_hbm [thread:$0]  %s150, 128, %s3, [#allocation3]
    $region25: #{_dff_forward.7} parent=1 // pred_fallthru
      _
    // Predicated region
    $region26: #{_dff_forward.7} parent=1 // pred_check
      _
    $region27: #{_dff_forward.7} parent=1 // pred_check_branch
      %154 = sbr.rel (0) target = $region29
    $region28: #{_dff_forward.7} parent=1 // pred_region
      %155 = dma.done [#allocation3], 128
    $region29: #{_dff_forward.7} parent=1 // pred_fallthru
      _
    %156 = vsyncpa [#allocation3], 1

</llo_original>
